<compile_context>
chip_gen: v5e
topology: v5e:2x2
jax: 0.10.0
libtpu: 0.0.40
codegen_flags: <defaults>
</compile_context>

<pallas_src>
import functools

import jax
import jax.numpy as jnp
from jax.experimental import pallas as pl
from jax.experimental.pallas import tpu as pltpu

_MIB = 1024 * 1024


def _round_up(v, m):
    return ((v + m - 1) // m) * m


def _vmem_limits():
    """(scoped_vmem_limit_bytes, per_step_double_buffered_budget_bytes)."""
    cap = None
    try:
        cap = getattr(pltpu.get_tpu_info(), "vmem_capacity_bytes", None)
    except Exception:
        cap = None
    if cap is None:
        cap = 64 * _MIB                      # conservative (v7x-sized) fallback
    if cap >= 100 * _MIB:                    # v5e / v6e: 128 MiB physical VMEM
        return 64 * _MIB, 40 * _MIB
    # v7x: 64 MiB physical -> stay well clear of the cap (tiles + f32 temps +
    # Mosaic internal scratch).
    return 48 * _MIB, 14 * _MIB


def _sublane_granularity(*dtypes):
    """Sublane packing granularity: 8 for 32-bit, 16 for bf16, 32 for int8."""
    g = 8
    for dt in dtypes:
        size = jnp.dtype(dt).itemsize
        g = max(g, 8 * max(1, 4 // size))
    return g


def _choose_tile_n(N, K, F, x_dtype, nagg_dtype, *, flat, step_budget):
    """Largest node tile fitting the double-buffered budget, split for megacore."""
    gran = _sublane_granularity(x_dtype, nagg_dtype)
    x_sz = jnp.dtype(x_dtype).itemsize
    n_sz = jnp.dtype(nagg_dtype).itemsize
    # Neighbor rows per node actually resident in the pipelined block: the 3-D
    # fallback pads K up to the dtype's sublane tile; the flat 2-D path does not.
    k_eff = K if flat else _round_up(K, 8 * max(1, 4 // n_sz))
    # Double-buffered pipeline tiles: x + h + out + neighbor block.
    pipeline = 2 * (3 * F * x_sz + k_eff * F * n_sz)
    # In-kernel f32 temporaries: accumulator + ~2 live F-wide casts.
    temps = 3 * F * 4
    per_node = pipeline + temps

    t = max(gran, (int(step_budget) // max(per_node, 1) // gran) * gran)

    if N < 2 * gran:
        return N                              # cannot split legally -> full extent

    # Megacore (v7x): aim for >=4 near-equal grid steps on larger N, >=2 otherwise.
    min_steps = 4 if N >= 8 * gran else 2
    steps = max(pl.cdiv(N, t), min_steps)
    tile = _round_up(pl.cdiv(N, steps), gran)
    if tile >= N:
        return N
    return max(tile, gran)


def _sanitize_tile_n(tile_n, N, gran):
    """Clamp/round a caller-supplied tile so the BlockSpec (8,128) rule holds."""
    tile_n = int(tile_n)
    if tile_n >= N:
        return N
    t = max(gran, (tile_n // gran) * gran)
    return N if t >= N else t


def _graph_app_kernel_flat(x_ref, nagg_ref, h_ref, o_ref, *, alpha,
                           num_neighbors, feat):
    # x_ref / h_ref / o_ref : [tile_n, F]; nagg_ref : [tile_n, K*F] (lane-dense).
    acc = x_ref[...].astype(jnp.float32)                  # self term
    for k in range(num_neighbors):                         # static unroll: VPU adds
        acc = acc + nagg_ref[:, k * feat:(k + 1) * feat].astype(jnp.float32)
    out = (1.0 - alpha) * acc + alpha * h_ref[...].astype(jnp.float32)
    o_ref[...] = out.astype(o_ref.dtype)


def _graph_app_kernel_3d(x_ref, nagg_ref, h_ref, o_ref, *, alpha, num_neighbors):
    # Fallback when F is not a multiple of 128: nagg_ref : [tile_n, K, F].
    acc = x_ref[...].astype(jnp.float32)                   # self term
    for k in range(num_neighbors):
        acc = acc + nagg_ref[:, k, :].astype(jnp.float32)
    out = (1.0 - alpha) * acc + alpha * h_ref[...].astype(jnp.float32)
    o_ref[...] = out.astype(o_ref.dtype)


def graph_app(x, neighbor_agg, h, neighbor, *, alpha, tile_n=None,
              donate_x=False):
    """Pallas implementation of GraphApp.forward. Returns (x_out, neighbor)."""
    N, F = x.shape
    n_nodes, K, f_dim = neighbor_agg.shape
    assert n_nodes == N and f_dim == F and h.shape == (N, F)

    vmem_limit, step_budget = _vmem_limits()
    flat = (F % 128 == 0)
    gran = _sublane_granularity(x.dtype, neighbor_agg.dtype)

    if tile_n is None:
        tile_n = _choose_tile_n(N, K, F, x.dtype, neighbor_agg.dtype,
                                flat=flat, step_budget=step_budget)
    else:
        tile_n = _sanitize_tile_n(tile_n, N, gran)

    grid = (pl.cdiv(N, tile_n),)       # ragged tail block padded/masked by Pallas

    if flat:
        # Free row-major view: [N, K, F] -> [N, K*F]; puts K on the lane axis.
        nagg_in = neighbor_agg.reshape(N, K * F)
        kernel = functools.partial(_graph_app_kernel_flat, alpha=float(alpha),
                                   num_neighbors=K, feat=F)
        nagg_spec = pl.BlockSpec((tile_n, K * F), lambda i: (i, 0))
    else:
        nagg_in = neighbor_agg
        kernel = functools.partial(_graph_app_kernel_3d, alpha=float(alpha),
                                   num_neighbors=K)
        nagg_spec = pl.BlockSpec((tile_n, K, F), lambda i: (i, 0, 0))

    row_spec = pl.BlockSpec((tile_n, F), lambda i: (i, 0))

    x_out = pl.pallas_call(
        kernel,
        out_shape=jax.ShapeDtypeStruct((N, F), x.dtype),
        grid_spec=pl.GridSpec(
            grid=grid,
            in_specs=[row_spec, nagg_spec, row_spec],
            out_specs=row_spec,
        ),
        input_output_aliases=({0: 0} if donate_x else {}),
        compiler_params=pltpu.CompilerParams(
            dimension_semantics=("parallel",),
            vmem_limit_bytes=vmem_limit,
        ),
    )(x, nagg_in, h)

    # `neighbor` is returned unchanged by the module (pure pass-through).
    return x_out, neighbor


def _reference(x, neighbor_agg, h, alpha):
    xf = x.astype(jnp.float32)
    nf_ = neighbor_agg.astype(jnp.float32)
    hf = h.astype(jnp.float32)
    agg = xf + jnp.sum(nf_, axis=1)
    out = (1.0 - alpha) * agg + alpha * hf
    return out.astype(x.dtype)


if __name__ == "__main__":
    key = jax.random.PRNGKey(0)
    alpha = 0.1

    # --- test 1: f32, lane-aligned F (flat path, auto tiling -> >=2 grid steps) ---
    N, K, F = 64, 8, 128
    k1, k2, k3, k4, key = jax.random.split(key, 5)
    x = jax.random.normal(k1, (N, F), dtype=jnp.float32)
    neighbor_agg = jax.random.normal(k2, (N, K, F), dtype=jnp.float32)
    h = jax.random.normal(k3, (N, F), dtype=jnp.float32)
    neighbor = jax.random.normal(k4, (N, K, F), dtype=jnp.float32)

    x_out, neighbor_out = graph_app(x, neighbor_agg, h, neighbor, alpha=alpha)
    x_out = jax.block_until_ready(x_out)
    ref = _reference(x, neighbor_agg, h, alpha)
    assert x_out.shape == (N, F)
    assert jnp.allclose(x_out, ref, atol=1e-5, rtol=1e-5)
    assert jnp.array_equal(neighbor_out, neighbor)

    # --- test 2: ragged N with forced tile (cdiv grid + tail masking) ---
    N2 = 200
    k1, k2, k3, key = jax.random.split(key, 4)
    x2 = jax.random.normal(k1, (N2, F), dtype=jnp.float32)
    nagg2 = jax.random.normal(k2, (N2, K, F), dtype=jnp.float32)
    h2 = jax.random.normal(k3, (N2, F), dtype=jnp.float32)
    x2_out, _ = graph_app(x2, nagg2, h2, None, alpha=alpha, tile_n=60)  # sanitized
    x2_out = jax.block_until_ready(x2_out)
    ref2 = _reference(x2, nagg2, h2, alpha)
    assert jnp.allclose(x2_out, ref2, atol=1e-5, rtol=1e-5)

    # --- test 3: bf16 storage (gran=16 tiling), f32 accumulation inside ---
    xb = x.astype(jnp.bfloat16)
    naggb = neighbor_agg.astype(jnp.bfloat16)
    hb = h.astype(jnp.bfloat16)
    xb_out, _ = graph_app(xb, naggb, hb, None, alpha=alpha)
    xb_out = jax.block_until_ready(xb_out)
    refb = _reference(xb, naggb, hb, alpha)
    assert xb_out.dtype == jnp.bfloat16
    assert jnp.allclose(xb_out.astype(jnp.float32), refb.astype(jnp.float32),
                        atol=5e-2, rtol=5e-2)

    # --- test 4: small hidden width (F=32, as in the APPNP module) -> 3-D path ---
    N3, K3, F3 = 48, 5, 32
    k1, k2, k3, key = jax.random.split(key, 4)
    x3 = jax.random.normal(k1, (N3, F3), dtype=jnp.float32)
    nagg3 = jax.random.normal(k2, (N3, K3, F3), dtype=jnp.float32)
    h3 = jax.random.normal(k3, (N3, F3), dtype=jnp.float32)
    x3_out, _ = graph_app(x3, nagg3, h3, None, alpha=alpha)
    x3_out = jax.block_until_ready(x3_out)
    ref3 = _reference(x3, nagg3, h3, alpha)
    assert jnp.allclose(x3_out, ref3, atol=1e-5, rtol=1e-5)

    print("KERNEL_OK")
</pallas_src>

<mosaic_0001>
module attributes {stable_mosaic.version = 11 : i64} {
  func.func @_graph_app_kernel_flat(%arg0: i32, %arg1: memref<16x128xf32, #tpu.memory_space<vmem>>, %arg2: memref<16x1024xf32, #tpu.memory_space<vmem>>, %arg3: memref<16x128xf32, #tpu.memory_space<vmem>>, %arg4: memref<16x128xf32, #tpu.memory_space<vmem>>) attributes {dimension_semantics = [#tpu.dimension_semantics<parallel>], iteration_bounds = array<i64: 4>, scalar_prefetch = 0 : i64, scratch_operands = 0 : i64, tpu.core_type = #tpu.core_type<tc>, window_params = [{transform_indices = @transform_0, window_bounds = array<i64: 16, 128>}, {transform_indices = @transform_1, window_bounds = array<i64: 16, 1024>}, {transform_indices = @transform_2, window_bounds = array<i64: 16, 128>}, {transform_indices = @transform_3, window_bounds = array<i64: 16, 128>}]} {
    %c0 = arith.constant 0 : index
    %c0_0 = arith.constant 0 : index
    %0 = vector.load %arg1[%c0, %c0_0] : memref<16x128xf32, #tpu.memory_space<vmem>>, vector<16x128xf32>
    %c0_1 = arith.constant 0 : index
    %c0_2 = arith.constant 0 : index
    %1 = vector.load %arg2[%c0_1, %c0_2] : memref<16x1024xf32, #tpu.memory_space<vmem>>, vector<16x128xf32>
    %2 = arith.addf %0, %1 : vector<16x128xf32>
    %c0_3 = arith.constant 0 : index
    %c128 = arith.constant 128 : index
    %3 = vector.load %arg2[%c0_3, %c128] : memref<16x1024xf32, #tpu.memory_space<vmem>>, vector<16x128xf32>
    %4 = arith.addf %2, %3 : vector<16x128xf32>
    %c0_4 = arith.constant 0 : index
    %c256 = arith.constant 256 : index
    %5 = vector.load %arg2[%c0_4, %c256] : memref<16x1024xf32, #tpu.memory_space<vmem>>, vector<16x128xf32>
    %6 = arith.addf %4, %5 : vector<16x128xf32>
    %c0_5 = arith.constant 0 : index
    %c384 = arith.constant 384 : index
    %7 = vector.load %arg2[%c0_5, %c384] : memref<16x1024xf32, #tpu.memory_space<vmem>>, vector<16x128xf32>
    %8 = arith.addf %6, %7 : vector<16x128xf32>
    %c0_6 = arith.constant 0 : index
    %c512 = arith.constant 512 : index
    %9 = vector.load %arg2[%c0_6, %c512] : memref<16x1024xf32, #tpu.memory_space<vmem>>, vector<16x128xf32>
    %10 = arith.addf %8, %9 : vector<16x128xf32>
    %c0_7 = arith.constant 0 : index
    %c640 = arith.constant 640 : index
    %11 = vector.load %arg2[%c0_7, %c640] : memref<16x1024xf32, #tpu.memory_space<vmem>>, vector<16x128xf32>
    %12 = arith.addf %10, %11 : vector<16x128xf32>
    %c0_8 = arith.constant 0 : index
    %c768 = arith.constant 768 : index
    %13 = vector.load %arg2[%c0_8, %c768] : memref<16x1024xf32, #tpu.memory_space<vmem>>, vector<16x128xf32>
    %14 = arith.addf %12, %13 : vector<16x128xf32>
    %c0_9 = arith.constant 0 : index
    %c896 = arith.constant 896 : index
    %15 = vector.load %arg2[%c0_9, %c896] : memref<16x1024xf32, #tpu.memory_space<vmem>>, vector<16x128xf32>
    %16 = arith.addf %14, %15 : vector<16x128xf32>
    %cst = arith.constant 0.899999976 : f32
    %17 = vector.broadcast %cst : f32 to vector<16x128xf32>
    %18 = arith.mulf %17, %16 : vector<16x128xf32>
    %c0_10 = arith.constant 0 : index
    %c0_11 = arith.constant 0 : index
    %19 = vector.load %arg3[%c0_10, %c0_11] : memref<16x128xf32, #tpu.memory_space<vmem>>, vector<16x128xf32>
    %cst_12 = arith.constant 1.000000e-01 : f32
    %20 = vector.broadcast %cst_12 : f32 to vector<16x128xf32>
    %21 = arith.mulf %20, %19 : vector<16x128xf32>
    %22 = arith.addf %18, %21 : vector<16x128xf32>
    %c0_13 = arith.constant 0 : index
    %c0_14 = arith.constant 0 : index
    %23 = vector.load %arg4[%c0_13, %c0_14] : memref<16x128xf32, #tpu.memory_space<vmem>>, vector<16x128xf32>
    tpu.vector_store %arg4[%c0_13, %c0_14], %22 {strides = array<i32>} : memref<16x128xf32, #tpu.memory_space<vmem>>, vector<16x128xf32>,
    return
  }
  func.func @transform_0(%arg0: i32) -> (i32, i32) {
    %c0_i32 = arith.constant 0 : i32
    %c0_i32_0 = arith.constant 0 : i32
    return %arg0, %c0_i32 : i32, i32
  }
  func.func @transform_1(%arg0: i32) -> (i32, i32) {
    %c0_i32 = arith.constant 0 : i32
    %c0_i32_0 = arith.constant 0 : i32
    return %arg0, %c0_i32 : i32, i32
  }
  func.func @transform_2(%arg0: i32) -> (i32, i32) {
    %c0_i32 = arith.constant 0 : i32
    %c0_i32_0 = arith.constant 0 : i32
    return %arg0, %c0_i32 : i32, i32
  }
  func.func @transform_3(%arg0: i32) -> (i32, i32) {
    %c0_i32 = arith.constant 0 : i32
    %c0_i32_0 = arith.constant 0 : i32
    return %arg0, %c0_i32 : i32, i32
  }
}

</mosaic_0001>

<llo_original>
// kernel: tpu_custom_call.1
$region0: #{tpu_custom_call.1}
  #allocation0 [shape = 'u32[]', space=smem, size = 0x4, offset = 0x4, fixed_abs, tag = 'smem constant byte address 0x4 - core index']
  #allocation1 [shape = 'u32[72,128]{1,0:T(1,128)}', space=vmem, size = 0x9000, scoped, tag = 'internal scratch']
  %s0 = inlined_call_operand.hbm [shape: f32[64,128], index: 0, kind: input, shape index: {}]
  %s1 = inlined_call_operand.hbm [shape: f32[64,1024], index: 1, kind: input, shape index: {}]
  %s2 = inlined_call_operand.hbm [shape: f32[64,128], index: 2, kind: input, shape index: {}]
  %s3 = inlined_call_operand.hbm [shape: f32[64,128], index: 3, kind: output, shape index: {}]
  %s4 = sld [smem:[#allocation0]]
  $region57: #{tpu_custom_call.1} parent=0
    _
  %s6 = ssub.s32 1, %s4
  %s7 = scalar_select 0, %s6, %s4
  $region1: #{tpu_custom_call.1} parent=0
    #allocation2 [shape = 'u8[16384]{0}', space=vmem, size = 0x4000, scoped, tag = 'input window, operand 0']
    #allocation3 [shape = 's32[2]{0}', space=sflag, size = 0x8, scoped, tag = 'scoped memory for tpu_custom_call.1']
    #allocation4 [shape = 's32[2]{0}', space=sflag, size = 0x8, scoped, tag = 'scoped memory for tpu_custom_call.1']
    #allocation5 [shape = 'u8[131072]{0}', space=vmem, size = 0x20000, scoped, tag = 'input window, operand 1']
    #allocation6 [shape = 's32[2]{0}', space=sflag, size = 0x8, scoped, tag = 'scoped memory for tpu_custom_call.1']
    #allocation7 [shape = 'u8[16384]{0}', space=vmem, size = 0x4000, scoped, tag = 'input window, operand 2']
    #allocation8 [shape = 'u8[16384]{0}', space=vmem, size = 0x4000, scoped, tag = 'output window, operand 0']
    %8 = vsyncpa [#allocation3], 0
    %s9 = scalar_lea.sflag [#allocation3], 1
    %10 = vsyncpa %s9, 0
    %11 = vsyncpa [#allocation6], 0
    %s12 = scalar_lea.sflag [#allocation6], 1
    %13 = vsyncpa %s12, 0
    %14 = vsyncpa [#allocation4], 0
    %s15 = scalar_lea.sflag [#allocation4], 1
    %16 = vsyncpa %s15, 0
    loop: start=0, step=1, limit=6
    $region2: #{tpu_custom_call.1} parent=1 // loop_pre_header
      _
    $region3: #{tpu_custom_call.1} parent=1 // loop_header
      %s18 = sphi 0, %s22
      %p19 = scmp.ge.s32.totalorder %s18, 6
      %s28 = sphi 0, %s30
      %s31 = sphi 0, %s28
      %s32 = sphi 0, %s31
      %s48 = sphi 0, %s32
      %s54 = sphi 0, %s56
      %s57 = sphi 0, %s54
      %s58 = sphi 0, %s57
      %s74 = sphi 0, %s58
      %s80 = sphi 0, %s82
      %s83 = sphi 0, %s80
      %s84 = sphi 0, %s83
      %s100 = sphi 0, %s84
      %s106 = sphi 0, %s108
      %s109 = sphi 0, %s106
      %s110 = sphi 0, %s109
      %s126 = sphi 0, %s110
    $region4: #{tpu_custom_call.1} parent=1 // loop_header_branch
      %21 = sbr.rel (%p19) target = $region8
    $region5: #{tpu_custom_call.1} parent=1 // loop_body
      %s23 = ssub.s32 %s18, 1
      %s24 = ssub.s32 %s18, 2
      %s25 = sadd.s32 %s18, 1
      %s26 = ssub.s32 %s18, %s25
      %p27 = scmp.eq.s32.totalorder %s26, 0
      %s29 = sadd.s32 %s28, 1
      %s30 = scalar_select %p27, %s28, %s29
      %p33 = pneg %p27
      %p34 = scmp.eq.s32.totalorder %s18, 3
      %p35 = por %p33, %p34
      %p36 = scmp.ne.s32.totalorder %s28, %s31
      %p37 = scmp.eq.s32.totalorder %s18, 0
      %p38 = por %p36, %p37
      %p39 = scmp.ne.s32.totalorder %s28, %s31
      %p40 = scmp.eq.s32.totalorder %s23, 3
      %p41 = por %p39, %p40
      %p42 = scmp.ne.s32.totalorder %s31, %s32
      %p43 = scmp.eq.s32.totalorder %s23, 0
      %p44 = por %p42, %p43
      %p45 = scmp.ne.s32.totalorder %s31, %s32
      %p46 = scmp.eq.s32.totalorder %s24, 3
      %p47 = por %p45, %p46
      %p49 = scmp.ne.s32.totalorder %s32, %s48
      %p50 = scmp.eq.s32.totalorder %s24, 0
      %p51 = por %p49, %p50
      %s52 = ssub.s32 %s18, %s25
      %p53 = scmp.eq.s32.totalorder %s52, 0
      %s55 = sadd.s32 %s54, 1
      %s56 = scalar_select %p53, %s54, %s55
      %p59 = pneg %p53
      %p60 = scmp.eq.s32.totalorder %s18, 3
      %p61 = por %p59, %p60
      %p62 = scmp.ne.s32.totalorder %s54, %s57
      %p63 = scmp.eq.s32.totalorder %s18, 0
      %p64 = por %p62, %p63
      %p65 = scmp.ne.s32.totalorder %s54, %s57
      %p66 = scmp.eq.s32.totalorder %s23, 3
      %p67 = por %p65, %p66
      %p68 = scmp.ne.s32.totalorder %s57, %s58
      %p69 = scmp.eq.s32.totalorder %s23, 0
      %p70 = por %p68, %p69
      %p71 = scmp.ne.s32.totalorder %s57, %s58
      %p72 = scmp.eq.s32.totalorder %s24, 3
      %p73 = por %p71, %p72
      %p75 = scmp.ne.s32.totalorder %s58, %s74
      %p76 = scmp.eq.s32.totalorder %s24, 0
      %p77 = por %p75, %p76
      %s78 = ssub.s32 %s18, %s25
      %p79 = scmp.eq.s32.totalorder %s78, 0
      %s81 = sadd.s32 %s80, 1
      %s82 = scalar_select %p79, %s80, %s81
      %p85 = pneg %p79
      %p86 = scmp.eq.s32.totalorder %s18, 3
      %p87 = por %p85, %p86
      %p88 = scmp.ne.s32.totalorder %s80, %s83
      %p89 = scmp.eq.s32.totalorder %s18, 0
      %p90 = por %p88, %p89
      %p91 = scmp.ne.s32.totalorder %s80, %s83
      %p92 = scmp.eq.s32.totalorder %s23, 3
      %p93 = por %p91, %p92
      %p94 = scmp.ne.s32.totalorder %s83, %s84
      %p95 = scmp.eq.s32.totalorder %s23, 0
      %p96 = por %p94, %p95
      %p97 = scmp.ne.s32.totalorder %s83, %s84
      %p98 = scmp.eq.s32.totalorder %s24, 3
      %p99 = por %p97, %p98
      %p101 = scmp.ne.s32.totalorder %s84, %s100
      %p102 = scmp.eq.s32.totalorder %s24, 0
      %p103 = por %p101, %p102
      %s104 = ssub.s32 %s18, %s25
      %p105 = scmp.eq.s32.totalorder %s104, 0
      %s107 = sadd.s32 %s106, 1
      %s108 = scalar_select %p105, %s106, %s107
      %p111 = pneg %p105
      %p112 = scmp.eq.s32.totalorder %s18, 3
      %p113 = por %p111, %p112
      %p114 = scmp.ne.s32.totalorder %s106, %s109
      %p115 = scmp.eq.s32.totalorder %s18, 0
      %p116 = por %p114, %p115
      %p117 = scmp.ne.s32.totalorder %s106, %s109
      %p118 = scmp.eq.s32.totalorder %s23, 3
      %p119 = por %p117, %p118
      %p120 = scmp.ne.s32.totalorder %s109, %s110
      %p121 = scmp.eq.s32.totalorder %s23, 0
      %p122 = por %p120, %p121
      %p123 = scmp.ne.s32.totalorder %s109, %s110
      %p124 = scmp.eq.s32.totalorder %s24, 3
      %p125 = por %p123, %p124
      %p127 = scmp.ne.s32.totalorder %s110, %s126
      %p128 = scmp.eq.s32.totalorder %s24, 0
      %p129 = por %p127, %p128
      %p130 = scmp.le.s32.totalorder 1, %s18
      %p131 = scmp.lt.s32.totalorder %s18, 5
      %p132 = pnand %p130, %p131
      %p133 = pneg %p132
      // Predicated region
      $region9: #{tpu_custom_call.1} parent=5 // pred_check
        _
      $region10: #{tpu_custom_call.1} parent=5 // pred_check_branch
        %135 = sbr.rel (%p132) target = $region12
      $region11: #{tpu_custom_call.1} parent=5 // pred_region
        %s136 = ssub.s32 %s18, 1
      $region12: #{tpu_custom_call.1} parent=5 // pred_fallthru
        _
      %p137 = scmp.lt.s32.totalorder %s18, 4
      // Predicated region
      $region13: #{tpu_custom_call.1} parent=5 // pred_check
        %p138 = pneg %p137
      $region14: #{tpu_custom_call.1} parent=5 // pred_check_branch
        %140 = sbr.rel (%p138) target = $region16
      $region15: #{tpu_custom_call.1} parent=5 // pred_region
        // Predicated region
        $region17: #{tpu_custom_call.1} parent=15 // pred_check
          %p141 = pneg %p38
        $region18: #{tpu_custom_call.1} parent=15 // pred_check_branch
          %143 = sbr.rel (%p141) target = $region20
        $region19: #{tpu_custom_call.1} parent=15 // pred_region
          %s144 = sand.u32 %s28, 1
          %s145 = scalar_lea.sflag [#allocation3], %s144
          %s146 = sand.u32 %s28, 1
          %s147 = smul.addr %s146, 16
          %s148 = scalar_lea.vmem [#allocation2], %s147
          %s149 = smul.u32 2, %s18
          %151 = vsyncadd %s145, 0
          %s152 = smul.addr %s149, 8
          %s153 = scalar_lea.hbm %s0, %s152
          %s154 = sshll.u32 %s153, 4
          %s155 = int_to_ptr.hbm [resolvable:$true] %s154
          %s156 = sshll.u32 %s148, 4
          %s157 = int_to_ptr.vmem [resolvable:$true] %s156
          %162 = dma.hbm_to_vmem [thread:$0]  %s155, 256, %s157, %s145, 128, 128, 8
        $region20: #{tpu_custom_call.1} parent=15 // pred_fallthru
          _
        // Predicated region
        $region21: #{tpu_custom_call.1} parent=15 // pred_check
          %p163 = pneg %p64
        $region22: #{tpu_custom_call.1} parent=15 // pred_check_branch
          %165 = sbr.rel (%p163) target = $region24
        $region23: #{tpu_custom_call.1} parent=15 // pred_region
          %s166 = sand.u32 %s18, 1
          %s167 = scalar_lea.sflag [#allocation6], %s166
          %s168 = sand.u32 %s54, 1
          %s169 = smul.addr %s168, 128
          %s170 = scalar_lea.vmem [#allocation5], %s169
          %s171 = smul.u32 2, %s18
          %173 = vsyncadd %s167, 0
          %s174 = smul.addr %s171, 8
          %s175 = smul.addr %s174, 8
          %s176 = scalar_lea.hbm %s1, %s175
          %s177 = sshll.u32 %s176, 4
          %s178 = int_to_ptr.hbm [resolvable:$true] %s177
          %s179 = sshll.u32 %s170, 4
          %s180 = int_to_ptr.vmem [resolvable:$true] %s179
          %185 = dma.hbm_to_vmem [thread:$0]  %s178, 2048, %s180, %s167, 1024, 1024, 64
        $region24: #{tpu_custom_call.1} parent=15 // pred_fallthru
          _
        // Predicated region
        $region25: #{tpu_custom_call.1} parent=15 // pred_check
          %p186 = pneg %p90
        $region26: #{tpu_custom_call.1} parent=15 // pred_check_branch
          %188 = sbr.rel (%p186) target = $region28
        $region27: #{tpu_custom_call.1} parent=15 // pred_region
          %s189 = sand.u32 %s18, 1
          %s190 = scalar_lea.sflag [#allocation6], %s189
          %s191 = sand.u32 %s80, 1
          %s192 = smul.addr %s191, 16
          %s193 = scalar_lea.vmem [#allocation7], %s192
          %s194 = smul.u32 2, %s18
          %196 = vsyncadd %s190, 0
          %s197 = smul.addr %s194, 8
          %s198 = scalar_lea.hbm %s2, %s197
          %s199 = sshll.u32 %s198, 4
          %s200 = int_to_ptr.hbm [resolvable:$true] %s199
          %s201 = sshll.u32 %s193, 4
          %s202 = int_to_ptr.vmem [resolvable:$true] %s201
          %207 = dma.hbm_to_vmem [thread:$0]  %s200, 256, %s202, %s190, 128, 128, 8
        $region28: #{tpu_custom_call.1} parent=15 // pred_fallthru
          _
      $region16: #{tpu_custom_call.1} parent=5 // pred_fallthru
        _
      %p208 = scmp.le.s32.totalorder 1, %s18
      %p209 = scmp.lt.s32.totalorder %s18, 5
      %p210 = pnand %p208, %p209
      %p211 = pneg %p210
      // Predicated region
      $region29: #{tpu_custom_call.1} parent=5 // pred_check
        _
      $region30: #{tpu_custom_call.1} parent=5 // pred_check_branch
        %213 = sbr.rel (%p210) target = $region32
      $region31: #{tpu_custom_call.1} parent=5 // pred_region
        %s214 = ssub.s32 %s18, 1
        %s215 = sand.u32 %s31, 1
        %s216 = scalar_lea.sflag [#allocation3], %s215
        %s217 = sand.u32 %s31, 1
        %s218 = smul.addr %s217, 16
        %s219 = scalar_lea.vmem [#allocation2], %s218
        // Predicated region
        $region33: #{tpu_custom_call.1} parent=31 // pred_check
          %p220 = pneg %p44
        $region34: #{tpu_custom_call.1} parent=31 // pred_check_branch
          %222 = sbr.rel (%p220) target = $region36
        $region35: #{tpu_custom_call.1} parent=31 // pred_region
          %224 = dma.done %s216, 256
        $region36: #{tpu_custom_call.1} parent=31 // pred_fallthru
          _
        %s225 = sand.u32 %s23, 1
        %s226 = scalar_lea.sflag [#allocation6], %s225
        %s227 = sand.u32 %s57, 1
        %s228 = smul.addr %s227, 128
        %s229 = scalar_lea.vmem [#allocation5], %s228
        // Predicated region
        $region37: #{tpu_custom_call.1} parent=31 // pred_check
          %p230 = pneg %p70
        $region38: #{tpu_custom_call.1} parent=31 // pred_check_branch
          %232 = sbr.rel (%p230) target = $region40
        $region39: #{tpu_custom_call.1} parent=31 // pred_region
          %234 = dma.done %s226, 2048
        $region40: #{tpu_custom_call.1} parent=31 // pred_fallthru
          _
        %s235 = sand.u32 %s23, 1
        %s236 = scalar_lea.sflag [#allocation6], %s235
        %s237 = sand.u32 %s83, 1
        %s238 = smul.addr %s237, 16
        %s239 = scalar_lea.vmem [#allocation7], %s238
        // Predicated region
        $region41: #{tpu_custom_call.1} parent=31 // pred_check
          %p240 = pneg %p96
        $region42: #{tpu_custom_call.1} parent=31 // pred_check_branch
          %242 = sbr.rel (%p240) target = $region44
        $region43: #{tpu_custom_call.1} parent=31 // pred_region
          %244 = dma.done %s236, 256
        $region44: #{tpu_custom_call.1} parent=31 // pred_fallthru
          _
        %s245 = sand.u32 %s31, 1
        %s246 = scalar_lea.sflag [#allocation3], %s245
        %s247 = sand.u32 %s31, 1
        %s248 = smul.addr %s247, 16
        %s249 = scalar_lea.vmem [#allocation2], %s248
        %p250 = pneg %p44
        %p251 = pneg %p41
        %s252 = sand.u32 %s23, 1
        %s253 = scalar_lea.sflag [#allocation6], %s252
        %s254 = sand.u32 %s57, 1
        %s255 = smul.addr %s254, 128
        %s256 = scalar_lea.vmem [#allocation5], %s255
        %p257 = pneg %p70
        %p258 = pneg %p67
        %s259 = sand.u32 %s23, 1
        %s260 = scalar_lea.sflag [#allocation6], %s259
        %s261 = sand.u32 %s83, 1
        %s262 = smul.addr %s261, 16
        %s263 = scalar_lea.vmem [#allocation7], %s262
        %p264 = pneg %p96
        %p265 = pneg %p93
        %p266 = pneg %p122
        %p267 = pneg %p119
        %s268 = sand.u32 %s109, 1
        %s269 = scalar_lea.sflag [#allocation4], %s268
        %s270 = sand.u32 %s109, 1
        %s271 = smul.addr %s270, 16
        %s272 = scalar_lea.vmem [#allocation8], %s271
        %s273 = smul.u32 2, %s23
        %s274 = smul.u32 2, %s23
        %s275 = smul.u32 2, %s23
        %s276 = smul.u32 2, %s23
        %v277 = vld [vmem:[%s219] sm:$0xff]
        %v278 = vld [vmem:[%s219 + $0x8] sm:$0xff]
        %v279 = vld [vmem:[%s229] sm:$0xff]
        %v280 = vld [vmem:[%s229 + $0x40] sm:$0xff]
        %v281 = vadd.f32 %v277, %v279
        %v282 = vadd.f32 %v278, %v280
        %v283 = vld [vmem:[%s229 + $0x8] sm:$0xff]
        %v284 = vld [vmem:[%s229 + $0x48] sm:$0xff]
        %v285 = vadd.f32 %v281, %v283
        %v286 = vadd.f32 %v282, %v284
        %v287 = vld [vmem:[%s229 + $0x10] sm:$0xff]
        %v288 = vld [vmem:[%s229 + $0x50] sm:$0xff]
        %v289 = vadd.f32 %v285, %v287
        %v290 = vadd.f32 %v286, %v288
        %v291 = vld [vmem:[%s229 + $0x18] sm:$0xff]
        %v292 = vld [vmem:[%s229 + $0x58] sm:$0xff]
        %v293 = vadd.f32 %v289, %v291
        %v294 = vadd.f32 %v290, %v292
        %v295 = vld [vmem:[%s229 + $0x20] sm:$0xff]
        %v296 = vld [vmem:[%s229 + $0x60] sm:$0xff]
        %v297 = vadd.f32 %v293, %v295
        %v298 = vadd.f32 %v294, %v296
        %v299 = vld [vmem:[%s229 + $0x28] sm:$0xff]
        %v300 = vld [vmem:[%s229 + $0x68] sm:$0xff]
        %v301 = vadd.f32 %v297, %v299
        %v302 = vadd.f32 %v298, %v300
        %v303 = vld [vmem:[%s229 + $0x30] sm:$0xff]
        %v304 = vld [vmem:[%s229 + $0x70] sm:$0xff]
        %v305 = vadd.f32 %v301, %v303
        %v306 = vadd.f32 %v302, %v304
        %v307 = vld [vmem:[%s229 + $0x38] sm:$0xff]
        %v308 = vld [vmem:[%s229 + $0x78] sm:$0xff]
        %v309 = vadd.f32 %v305, %v307
        %v310 = vadd.f32 %v306, %v308
        %v311 = vmul.f32 %v309, 0.9
        %v312 = vmul.f32 %v310, 0.9
        %v313 = vld [vmem:[%s239] sm:$0xff]
        %v314 = vld [vmem:[%s239 + $0x8] sm:$0xff]
        %v315 = vmul.f32 %v313, 0.1
        %v316 = vmul.f32 %v314, 0.1
        %v317 = vadd.f32 %v311, %v315
        %v318 = vadd.f32 %v312, %v316
        %319 = vst [vmem:[%s272] sm:$0xff] %v317
        %320 = vst [vmem:[%s272 + $0x8] sm:$0xff] %v318
        %s321 = sand.u32 %s109, 1
        %s322 = scalar_lea.sflag [#allocation4], %s321
        %s323 = sand.u32 %s109, 1
        %s324 = smul.addr %s323, 16
        %s325 = scalar_lea.vmem [#allocation8], %s324
        // Predicated region
        $region45: #{tpu_custom_call.1} parent=31 // pred_check
          %p326 = pneg %p119
        $region46: #{tpu_custom_call.1} parent=31 // pred_check_branch
          %328 = sbr.rel (%p326) target = $region48
        $region47: #{tpu_custom_call.1} parent=31 // pred_region
          %s329 = smul.u32 2, %s23
          %331 = vsyncadd %s322, 0
          %s332 = smul.addr %s329, 8
          %s333 = scalar_lea.hbm %s3, %s332
          %s334 = sshll.u32 %s325, 4
          %s335 = int_to_ptr.vmem [resolvable:$true] %s334
          %s336 = sshll.u32 %s333, 4
          %s337 = int_to_ptr.hbm [resolvable:$true] %s336
          %342 = dma.vmem_to_hbm [thread:$0]  %s335, 256, %s337, %s322, 128, 128, 8
        $region48: #{tpu_custom_call.1} parent=31 // pred_fallthru
          _
      $region32: #{tpu_custom_call.1} parent=5 // pred_fallthru
        _
      %p343 = scmp.le.s32.totalorder 2, %s18
      // Predicated region
      $region49: #{tpu_custom_call.1} parent=5 // pred_check
        %p344 = pneg %p343
      $region50: #{tpu_custom_call.1} parent=5 // pred_check_branch
        %346 = sbr.rel (%p344) target = $region52
      $region51: #{tpu_custom_call.1} parent=5 // pred_region
        %s347 = ssub.s32 %s18, 2
        // Predicated region
        $region53: #{tpu_custom_call.1} parent=51 // pred_check
          %p348 = pneg %p125
        $region54: #{tpu_custom_call.1} parent=51 // pred_check_branch
          %350 = sbr.rel (%p348) target = $region56
        $region55: #{tpu_custom_call.1} parent=51 // pred_region
          %s351 = sand.u32 %s110, 1
          %s352 = scalar_lea.sflag [#allocation4], %s351
          %s353 = sand.u32 %s110, 1
          %s354 = smul.addr %s353, 16
          %s355 = scalar_lea.vmem [#allocation8], %s354
          %357 = dma.done %s352, 256
        $region56: #{tpu_custom_call.1} parent=51 // pred_fallthru
          _
      $region52: #{tpu_custom_call.1} parent=5 // pred_fallthru
        _
    $region6: #{tpu_custom_call.1} parent=1 // loop_footer
      %s22 = sadd.s32 1, %s18
    $region7: #{tpu_custom_call.1} parent=1 // loop_footer_branch
      %17 = sbr.rel target = $region3
    $region8: #{tpu_custom_call.1} parent=1 // loop_exit
      _
    %358 = vsyncpa [#allocation3], 1
    %s359 = scalar_lea.sflag [#allocation3], 1
    %360 = vsyncpa %s359, 1
    %361 = vsyncpa [#allocation6], 1
    %s362 = scalar_lea.sflag [#allocation6], 1
    %363 = vsyncpa %s362, 1
    %364 = vsyncpa [#allocation4], 1
    %s365 = scalar_lea.sflag [#allocation4], 1
    %366 = vsyncpa %s365, 1

</llo_original>
